<compile_context>
chip_gen: v5e
topology: v5e:2x2
jax: 0.10.0
libtpu: 0.0.40
codegen_flags: <defaults>
</compile_context>

<pallas_src>
import jax
import jax.numpy as jnp
from jax import lax
from jax.experimental import pallas as pl
from jax.experimental.pallas import tpu as pltpu


def _make_rnn_recurrence_kernel(n_layers, unroll):
    """Kernel: sequential multi-layer tanh-RNN recurrence, single invocation.

    Inputs (all whole-array VMEM blocks, loaded once):
      x0_ref    : (S, B, H)  pre-projected layer-0 input (emb @ W_ih0 + b0)
      whh0_ref  : (H, H)     layer-0 recurrent weight
      then, for each layer l >= 1:
        w_cat[l-1] : (2H, H)  pre-stacked [W_ih_l; W_hh_l]
        b[l-1]     : (1, H)   combined bias
      out_ref   : (S, B, H)  top-layer hidden state per timestep
    """
    L = n_layers

    def kernel(x0_ref, whh0_ref, *args):
        n_extra = L - 1
        w_cat_refs = args[0:n_extra]
        b_refs = args[n_extra:2 * n_extra]
        out_ref = args[2 * n_extra]

        S, B, H = x0_ref.shape

        # ---- hoist all weight/bias loads + the bias broadcast out of the loop ----
        whh0 = whh0_ref[...]
        w_cats = [w_cat_refs[l][...] for l in range(n_extra)]
        b_bcast = [jnp.broadcast_to(b_refs[l][...], (B, H)) for l in range(n_extra)]

        def step(t, hs):
            hs = list(hs)
            # Layer 0: input projection + bias were hoisted out of the recurrence.
            h0 = jnp.tanh(
                x0_ref[t]
                + jnp.dot(hs[0], whh0, preferred_element_type=jnp.float32)
            )
            hs[0] = h0
            x = h0
            for l in range(1, L):  # static (unrolled) layer loop
                # Fused input+recurrent dot: [x, h_l] (B,2H) @ [W_ih;W_hh] (2H,H).
                xh = jnp.concatenate([x, hs[l]], axis=-1)
                hl = jnp.tanh(
                    jnp.dot(xh, w_cats[l - 1],
                            preferred_element_type=jnp.float32)
                    + b_bcast[l - 1]
                )
                hs[l] = hl
                x = hl
            out_ref[t] = x.astype(out_ref.dtype)
            return tuple(hs)

        h_init = tuple(jnp.zeros((B, H), jnp.float32) for _ in range(L))
        lax.fori_loop(0, S, step, h_init, unroll=unroll)

    return kernel


def model_forward(x_idx, emb_table, w_ih_list, w_hh_list, b_list, w_out, b_out):
    """Pallas implementation of Model.forward. Returns (S, O, B) like PyTorch."""
    S, B = x_idx.shape
    E = emb_table.shape[1]
    H = w_hh_list[0].shape[0]
    O = w_out.shape[1]
    L = len(w_ih_list)

    # ---- XLA glue: embedding gather + batched layer-0 input projection ----
    emb = jnp.take(emb_table, x_idx, axis=0)                         # (S, B, E)
    x0 = jnp.dot(emb.reshape(S * B, E), w_ih_list[0],
                 precision=lax.Precision.HIGHEST,
                 preferred_element_type=jnp.float32) + b_list[0]     # one big matmul
    x0 = x0.reshape(S, B, H).astype(jnp.float32)

    # Pre-stack [W_ih_l; W_hh_l] for the in-kernel fused dot (layers >= 1).
    w_cat_list = [jnp.concatenate([w_ih_list[l], w_hh_list[l]], axis=0)
                  for l in range(1, L)]

    unroll = max(1, min(S, 8))
    kernel = _make_rnn_recurrence_kernel(L, unroll)

    vmem = pl.BlockSpec(memory_space=pltpu.MemorySpace.VMEM)
    n_inputs = 2 + 2 * (L - 1)

    h_top = pl.pallas_call(
        kernel,
        out_shape=jax.ShapeDtypeStruct((S, B, H), jnp.float32),
        in_specs=[vmem] * n_inputs,
        out_specs=vmem,
    )(x0, w_hh_list[0], *w_cat_list, *b_list[1:])

    # ---- XLA glue: batched output projection (Conv2d(1,O,(1,H)) == dense H->O) ----
    y = jnp.dot(h_top.reshape(S * B, H), w_out,
                precision=lax.Precision.HIGHEST,
                preferred_element_type=jnp.float32) + b_out          # (S*B, O)
    y = y.reshape(S, B, O)
    # PyTorch: (S,B,H) -> unsqueeze(1) -> Conv2d -> (S,O,B,1) -> squeeze(-1)
    return jnp.transpose(y, (0, 2, 1))                               # (S, O, B)


def reference_forward(x_idx, emb_table, w_ih_list, w_hh_list, b_list, w_out, b_out):
    """Pure-JAX reference matching PyTorch semantics."""
    S, B = x_idx.shape
    H = w_hh_list[0].shape[0]
    L = len(w_ih_list)
    emb = jnp.take(emb_table, x_idx, axis=0)
    h = [jnp.zeros((B, H), jnp.float32) for _ in range(L)]
    outs = []
    for t in range(S):
        inp = emb[t]
        for l in range(L):
            h[l] = jnp.tanh(inp @ w_ih_list[l] + h[l] @ w_hh_list[l] + b_list[l])
            inp = h[l]
        outs.append(inp @ w_out + b_out)
    out = jnp.stack(outs, axis=0)              # (S, B, O)
    return jnp.transpose(out, (0, 2, 1))       # (S, O, B)


if __name__ == "__main__":
    VOCAB, EMB, HID, LAYERS, OUT = 16, 32, 32, 2, 8
    SEQ, BATCH = 8, 4

    key = jax.random.PRNGKey(0)
    keys = jax.random.split(key, 16)

    emb_table = jax.random.normal(keys[0], (VOCAB, EMB), jnp.float32) * 0.5

    w_ih_list, w_hh_list, b_list = [], [], []
    for l in range(LAYERS):
        in_dim = EMB if l == 0 else HID
        w_ih_list.append(jax.random.normal(keys[1 + 3 * l], (in_dim, HID), jnp.float32) * 0.2)
        w_hh_list.append(jax.random.normal(keys[2 + 3 * l], (HID, HID), jnp.float32) * 0.2)
        b_ih = jax.random.normal(keys[3 + 3 * l], (HID,), jnp.float32) * 0.1
        b_hh = jax.random.normal(keys[3 + 3 * l], (HID,), jnp.float32) * 0.1
        b_list.append((b_ih + b_hh).reshape(1, HID))

    # Conv2d(1, OUT, (1, HID)): weight (OUT,1,1,HID) -> (HID, OUT), bias (OUT,)
    w_out = jax.random.normal(keys[10], (HID, OUT), jnp.float32) * 0.2
    b_out = (jax.random.normal(keys[11], (OUT,), jnp.float32) * 0.1).reshape(1, OUT)

    x_idx = jax.random.randint(keys[12], (SEQ, BATCH), 0, VOCAB, dtype=jnp.int32)

    y = model_forward(x_idx, emb_table, w_ih_list, w_hh_list, b_list, w_out, b_out)
    y = jax.block_until_ready(y)

    y_ref = reference_forward(x_idx, emb_table, w_ih_list, w_hh_list, b_list, w_out, b_out)

    assert y.shape == (SEQ, OUT, BATCH), y.shape
    assert jnp.allclose(y, y_ref, atol=1e-4, rtol=1e-4), float(jnp.max(jnp.abs(y - y_ref)))
    print("KERNEL_OK")
</pallas_src>

<mosaic_0001>
module attributes {stable_mosaic.version = 11 : i64} {
  func.func @kernel(%arg0: memref<8x4x32xf32, #tpu.memory_space<vmem>>, %arg1: memref<32x32xf32, #tpu.memory_space<vmem>>, %arg2: memref<64x32xf32, #tpu.memory_space<vmem>>, %arg3: memref<1x32xf32, #tpu.memory_space<vmem>>, %arg4: memref<8x4x32xf32, #tpu.memory_space<vmem>>) attributes {dimension_semantics = [], scalar_prefetch = 0 : i64, scratch_operands = 0 : i64, tpu.core_type = #tpu.core_type<tc>} {
    %c0 = arith.constant 0 : index
    %c0_0 = arith.constant 0 : index
    %0 = vector.load %arg1[%c0, %c0_0] : memref<32x32xf32, #tpu.memory_space<vmem>>, vector<32x32xf32>
    %c0_1 = arith.constant 0 : index
    %c0_2 = arith.constant 0 : index
    %1 = vector.load %arg2[%c0_1, %c0_2] : memref<64x32xf32, #tpu.memory_space<vmem>>, vector<64x32xf32>
    %c0_3 = arith.constant 0 : index
    %c0_4 = arith.constant 0 : index
    %2 = vector.load %arg3[%c0_3, %c0_4] : memref<1x32xf32, #tpu.memory_space<vmem>>, vector<1x32xf32>
    %3 = vector.shape_cast %2 : vector<1x32xf32> to vector<1x32xf32>
    %4 = vector.broadcast %3 : vector<1x32xf32> to vector<4x32xf32>
    %cst = arith.constant 0.000000e+00 : f32
    %5 = vector.broadcast %cst : f32 to vector<4x32xf32>
    %cst_5 = arith.constant 0.000000e+00 : f32
    %6 = vector.broadcast %cst_5 : f32 to vector<4x32xf32>
    %c0_i32 = arith.constant 0 : i32
    %7 = arith.index_cast %c0_i32 : i32 to index
    %c0_6 = arith.constant 0 : index
    %c0_7 = arith.constant 0 : index
    %8 = vector.load %arg0[%7, %c0_6, %c0_7] : memref<8x4x32xf32, #tpu.memory_space<vmem>>, vector<1x4x32xf32>
    %9 = vector.shape_cast %8 : vector<1x4x32xf32> to vector<4x32xf32>
    %cst_8 = arith.constant dense<0.000000e+00> : vector<4x32xf32>
    %10 = tpu.matmul %5, %0, %cst_8 {dimension_numbers = #tpu.dot_dimension_numbers<[1], [0], [0], [1], [0, 0, 1, 1], [], []>} : vector<4x32xf32>, vector<32x32xf32>, vector<4x32xf32> -> vector<4x32xf32>
    %11 = arith.addf %9, %10 : vector<4x32xf32>
    %12 = math.tanh %11 : vector<4x32xf32>
    %13 = tpu.concatenate %12, %6 in 1 : vector<4x32xf32>, vector<4x32xf32> -> vector<4x64xf32>
    %cst_9 = arith.constant dense<0.000000e+00> : vector<4x32xf32>
    %14 = tpu.matmul %13, %1, %cst_9 {dimension_numbers = #tpu.dot_dimension_numbers<[1], [0], [0], [1], [0, 0, 1, 1], [], []>} : vector<4x64xf32>, vector<64x32xf32>, vector<4x32xf32> -> vector<4x32xf32>
    %15 = arith.addf %14, %4 : vector<4x32xf32>
    %16 = math.tanh %15 : vector<4x32xf32>
    %17 = arith.index_cast %c0_i32 : i32 to index
    %c0_10 = arith.constant 0 : index
    %c0_11 = arith.constant 0 : index
    %18 = vector.load %arg4[%17, %c0_10, %c0_11] : memref<8x4x32xf32, #tpu.memory_space<vmem>>, vector<1x4x32xf32>
    %19 = vector.shape_cast %18 : vector<1x4x32xf32> to vector<4x32xf32>
    %20 = vector.shape_cast %16 : vector<4x32xf32> to vector<1x4x32xf32>
    tpu.vector_store %arg4[%17, %c0_10, %c0_11], %20 {strides = array<i32>} : memref<8x4x32xf32, #tpu.memory_space<vmem>>, vector<1x4x32xf32>,
    %c1_i32 = arith.constant 1 : i32
    %21 = arith.index_cast %c1_i32 : i32 to index
    %c0_12 = arith.constant 0 : index
    %c0_13 = arith.constant 0 : index
    %22 = vector.load %arg0[%21, %c0_12, %c0_13] : memref<8x4x32xf32, #tpu.memory_space<vmem>>, vector<1x4x32xf32>
    %23 = vector.shape_cast %22 : vector<1x4x32xf32> to vector<4x32xf32>
    %cst_14 = arith.constant dense<0.000000e+00> : vector<4x32xf32>
    %24 = tpu.matmul %12, %0, %cst_14 {dimension_numbers = #tpu.dot_dimension_numbers<[1], [0], [0], [1], [0, 0, 1, 1], [], []>} : vector<4x32xf32>, vector<32x32xf32>, vector<4x32xf32> -> vector<4x32xf32>
    %25 = arith.addf %23, %24 : vector<4x32xf32>
    %26 = math.tanh %25 : vector<4x32xf32>
    %27 = tpu.concatenate %26, %16 in 1 : vector<4x32xf32>, vector<4x32xf32> -> vector<4x64xf32>
    %cst_15 = arith.constant dense<0.000000e+00> : vector<4x32xf32>
    %28 = tpu.matmul %27, %1, %cst_15 {dimension_numbers = #tpu.dot_dimension_numbers<[1], [0], [0], [1], [0, 0, 1, 1], [], []>} : vector<4x64xf32>, vector<64x32xf32>, vector<4x32xf32> -> vector<4x32xf32>
    %29 = arith.addf %28, %4 : vector<4x32xf32>
    %30 = math.tanh %29 : vector<4x32xf32>
    %31 = arith.index_cast %c1_i32 : i32 to index
    %c0_16 = arith.constant 0 : index
    %c0_17 = arith.constant 0 : index
    %32 = vector.load %arg4[%31, %c0_16, %c0_17] : memref<8x4x32xf32, #tpu.memory_space<vmem>>, vector<1x4x32xf32>
    %33 = vector.shape_cast %32 : vector<1x4x32xf32> to vector<4x32xf32>
    %34 = vector.shape_cast %30 : vector<4x32xf32> to vector<1x4x32xf32>
    tpu.vector_store %arg4[%31, %c0_16, %c0_17], %34 {strides = array<i32>} : memref<8x4x32xf32, #tpu.memory_space<vmem>>, vector<1x4x32xf32>,
    %c2_i32 = arith.constant 2 : i32
    %35 = arith.index_cast %c2_i32 : i32 to index
    %c0_18 = arith.constant 0 : index
    %c0_19 = arith.constant 0 : index
    %36 = vector.load %arg0[%35, %c0_18, %c0_19] : memref<8x4x32xf32, #tpu.memory_space<vmem>>, vector<1x4x32xf32>
    %37 = vector.shape_cast %36 : vector<1x4x32xf32> to vector<4x32xf32>
    %cst_20 = arith.constant dense<0.000000e+00> : vector<4x32xf32>
    %38 = tpu.matmul %26, %0, %cst_20 {dimension_numbers = #tpu.dot_dimension_numbers<[1], [0], [0], [1], [0, 0, 1, 1], [], []>} : vector<4x32xf32>, vector<32x32xf32>, vector<4x32xf32> -> vector<4x32xf32>
    %39 = arith.addf %37, %38 : vector<4x32xf32>
    %40 = math.tanh %39 : vector<4x32xf32>
    %41 = tpu.concatenate %40, %30 in 1 : vector<4x32xf32>, vector<4x32xf32> -> vector<4x64xf32>
    %cst_21 = arith.constant dense<0.000000e+00> : vector<4x32xf32>
    %42 = tpu.matmul %41, %1, %cst_21 {dimension_numbers = #tpu.dot_dimension_numbers<[1], [0], [0], [1], [0, 0, 1, 1], [], []>} : vector<4x64xf32>, vector<64x32xf32>, vector<4x32xf32> -> vector<4x32xf32>
    %43 = arith.addf %42, %4 : vector<4x32xf32>
    %44 = math.tanh %43 : vector<4x32xf32>
    %45 = arith.index_cast %c2_i32 : i32 to index
    %c0_22 = arith.constant 0 : index
    %c0_23 = arith.constant 0 : index
    %46 = vector.load %arg4[%45, %c0_22, %c0_23] : memref<8x4x32xf32, #tpu.memory_space<vmem>>, vector<1x4x32xf32>
    %47 = vector.shape_cast %46 : vector<1x4x32xf32> to vector<4x32xf32>
    %48 = vector.shape_cast %44 : vector<4x32xf32> to vector<1x4x32xf32>
    tpu.vector_store %arg4[%45, %c0_22, %c0_23], %48 {strides = array<i32>} : memref<8x4x32xf32, #tpu.memory_space<vmem>>, vector<1x4x32xf32>,
    %c3_i32 = arith.constant 3 : i32
    %49 = arith.index_cast %c3_i32 : i32 to index
    %c0_24 = arith.constant 0 : index
    %c0_25 = arith.constant 0 : index
    %50 = vector.load %arg0[%49, %c0_24, %c0_25] : memref<8x4x32xf32, #tpu.memory_space<vmem>>, vector<1x4x32xf32>
    %51 = vector.shape_cast %50 : vector<1x4x32xf32> to vector<4x32xf32>
    %cst_26 = arith.constant dense<0.000000e+00> : vector<4x32xf32>
    %52 = tpu.matmul %40, %0, %cst_26 {dimension_numbers = #tpu.dot_dimension_numbers<[1], [0], [0], [1], [0, 0, 1, 1], [], []>} : vector<4x32xf32>, vector<32x32xf32>, vector<4x32xf32> -> vector<4x32xf32>
    %53 = arith.addf %51, %52 : vector<4x32xf32>
    %54 = math.tanh %53 : vector<4x32xf32>
    %55 = tpu.concatenate %54, %44 in 1 : vector<4x32xf32>, vector<4x32xf32> -> vector<4x64xf32>
    %cst_27 = arith.constant dense<0.000000e+00> : vector<4x32xf32>
    %56 = tpu.matmul %55, %1, %cst_27 {dimension_numbers = #tpu.dot_dimension_numbers<[1], [0], [0], [1], [0, 0, 1, 1], [], []>} : vector<4x64xf32>, vector<64x32xf32>, vector<4x32xf32> -> vector<4x32xf32>
    %57 = arith.addf %56, %4 : vector<4x32xf32>
    %58 = math.tanh %57 : vector<4x32xf32>
    %59 = arith.index_cast %c3_i32 : i32 to index
    %c0_28 = arith.constant 0 : index
    %c0_29 = arith.constant 0 : index
    %60 = vector.load %arg4[%59, %c0_28, %c0_29] : memref<8x4x32xf32, #tpu.memory_space<vmem>>, vector<1x4x32xf32>
    %61 = vector.shape_cast %60 : vector<1x4x32xf32> to vector<4x32xf32>
    %62 = vector.shape_cast %58 : vector<4x32xf32> to vector<1x4x32xf32>
    tpu.vector_store %arg4[%59, %c0_28, %c0_29], %62 {strides = array<i32>} : memref<8x4x32xf32, #tpu.memory_space<vmem>>, vector<1x4x32xf32>,
    %c4_i32 = arith.constant 4 : i32
    %63 = arith.index_cast %c4_i32 : i32 to index
    %c0_30 = arith.constant 0 : index
    %c0_31 = arith.constant 0 : index
    %64 = vector.load %arg0[%63, %c0_30, %c0_31] : memref<8x4x32xf32, #tpu.memory_space<vmem>>, vector<1x4x32xf32>
    %65 = vector.shape_cast %64 : vector<1x4x32xf32> to vector<4x32xf32>
    %cst_32 = arith.constant dense<0.000000e+00> : vector<4x32xf32>
    %66 = tpu.matmul %54, %0, %cst_32 {dimension_numbers = #tpu.dot_dimension_numbers<[1], [0], [0], [1], [0, 0, 1, 1], [], []>} : vector<4x32xf32>, vector<32x32xf32>, vector<4x32xf32> -> vector<4x32xf32>
    %67 = arith.addf %65, %66 : vector<4x32xf32>
    %68 = math.tanh %67 : vector<4x32xf32>
    %69 = tpu.concatenate %68, %58 in 1 : vector<4x32xf32>, vector<4x32xf32> -> vector<4x64xf32>
    %cst_33 = arith.constant dense<0.000000e+00> : vector<4x32xf32>
    %70 = tpu.matmul %69, %1, %cst_33 {dimension_numbers = #tpu.dot_dimension_numbers<[1], [0], [0], [1], [0, 0, 1, 1], [], []>} : vector<4x64xf32>, vector<64x32xf32>, vector<4x32xf32> -> vector<4x32xf32>
    %71 = arith.addf %70, %4 : vector<4x32xf32>
    %72 = math.tanh %71 : vector<4x32xf32>
    %73 = arith.index_cast %c4_i32 : i32 to index
    %c0_34 = arith.constant 0 : index
    %c0_35 = arith.constant 0 : index
    %74 = vector.load %arg4[%73, %c0_34, %c0_35] : memref<8x4x32xf32, #tpu.memory_space<vmem>>, vector<1x4x32xf32>
    %75 = vector.shape_cast %74 : vector<1x4x32xf32> to vector<4x32xf32>
    %76 = vector.shape_cast %72 : vector<4x32xf32> to vector<1x4x32xf32>
    tpu.vector_store %arg4[%73, %c0_34, %c0_35], %76 {strides = array<i32>} : memref<8x4x32xf32, #tpu.memory_space<vmem>>, vector<1x4x32xf32>,
    %c5_i32 = arith.constant 5 : i32
    %77 = arith.index_cast %c5_i32 : i32 to index
    %c0_36 = arith.constant 0 : index
    %c0_37 = arith.constant 0 : index
    %78 = vector.load %arg0[%77, %c0_36, %c0_37] : memref<8x4x32xf32, #tpu.memory_space<vmem>>, vector<1x4x32xf32>
    %79 = vector.shape_cast %78 : vector<1x4x32xf32> to vector<4x32xf32>
    %cst_38 = arith.constant dense<0.000000e+00> : vector<4x32xf32>
    %80 = tpu.matmul %68, %0, %cst_38 {dimension_numbers = #tpu.dot_dimension_numbers<[1], [0], [0], [1], [0, 0, 1, 1], [], []>} : vector<4x32xf32>, vector<32x32xf32>, vector<4x32xf32> -> vector<4x32xf32>
    %81 = arith.addf %79, %80 : vector<4x32xf32>
    %82 = math.tanh %81 : vector<4x32xf32>
    %83 = tpu.concatenate %82, %72 in 1 : vector<4x32xf32>, vector<4x32xf32> -> vector<4x64xf32>
    %cst_39 = arith.constant dense<0.000000e+00> : vector<4x32xf32>
    %84 = tpu.matmul %83, %1, %cst_39 {dimension_numbers = #tpu.dot_dimension_numbers<[1], [0], [0], [1], [0, 0, 1, 1], [], []>} : vector<4x64xf32>, vector<64x32xf32>, vector<4x32xf32> -> vector<4x32xf32>
    %85 = arith.addf %84, %4 : vector<4x32xf32>
    %86 = math.tanh %85 : vector<4x32xf32>
    %87 = arith.index_cast %c5_i32 : i32 to index
    %c0_40 = arith.constant 0 : index
    %c0_41 = arith.constant 0 : index
    %88 = vector.load %arg4[%87, %c0_40, %c0_41] : memref<8x4x32xf32, #tpu.memory_space<vmem>>, vector<1x4x32xf32>
    %89 = vector.shape_cast %88 : vector<1x4x32xf32> to vector<4x32xf32>
    %90 = vector.shape_cast %86 : vector<4x32xf32> to vector<1x4x32xf32>
    tpu.vector_store %arg4[%87, %c0_40, %c0_41], %90 {strides = array<i32>} : memref<8x4x32xf32, #tpu.memory_space<vmem>>, vector<1x4x32xf32>,
    %c6_i32 = arith.constant 6 : i32
    %91 = arith.index_cast %c6_i32 : i32 to index
    %c0_42 = arith.constant 0 : index
    %c0_43 = arith.constant 0 : index
    %92 = vector.load %arg0[%91, %c0_42, %c0_43] : memref<8x4x32xf32, #tpu.memory_space<vmem>>, vector<1x4x32xf32>
    %93 = vector.shape_cast %92 : vector<1x4x32xf32> to vector<4x32xf32>
    %cst_44 = arith.constant dense<0.000000e+00> : vector<4x32xf32>
    %94 = tpu.matmul %82, %0, %cst_44 {dimension_numbers = #tpu.dot_dimension_numbers<[1], [0], [0], [1], [0, 0, 1, 1], [], []>} : vector<4x32xf32>, vector<32x32xf32>, vector<4x32xf32> -> vector<4x32xf32>
    %95 = arith.addf %93, %94 : vector<4x32xf32>
    %96 = math.tanh %95 : vector<4x32xf32>
    %97 = tpu.concatenate %96, %86 in 1 : vector<4x32xf32>, vector<4x32xf32> -> vector<4x64xf32>
    %cst_45 = arith.constant dense<0.000000e+00> : vector<4x32xf32>
    %98 = tpu.matmul %97, %1, %cst_45 {dimension_numbers = #tpu.dot_dimension_numbers<[1], [0], [0], [1], [0, 0, 1, 1], [], []>} : vector<4x64xf32>, vector<64x32xf32>, vector<4x32xf32> -> vector<4x32xf32>
    %99 = arith.addf %98, %4 : vector<4x32xf32>
    %100 = math.tanh %99 : vector<4x32xf32>
    %101 = arith.index_cast %c6_i32 : i32 to index
    %c0_46 = arith.constant 0 : index
    %c0_47 = arith.constant 0 : index
    %102 = vector.load %arg4[%101, %c0_46, %c0_47] : memref<8x4x32xf32, #tpu.memory_space<vmem>>, vector<1x4x32xf32>
    %103 = vector.shape_cast %102 : vector<1x4x32xf32> to vector<4x32xf32>
    %104 = vector.shape_cast %100 : vector<4x32xf32> to vector<1x4x32xf32>
    tpu.vector_store %arg4[%101, %c0_46, %c0_47], %104 {strides = array<i32>} : memref<8x4x32xf32, #tpu.memory_space<vmem>>, vector<1x4x32xf32>,
    %c7_i32 = arith.constant 7 : i32
    %105 = arith.index_cast %c7_i32 : i32 to index
    %c0_48 = arith.constant 0 : index
    %c0_49 = arith.constant 0 : index
    %106 = vector.load %arg0[%105, %c0_48, %c0_49] : memref<8x4x32xf32, #tpu.memory_space<vmem>>, vector<1x4x32xf32>
    %107 = vector.shape_cast %106 : vector<1x4x32xf32> to vector<4x32xf32>
    %cst_50 = arith.constant dense<0.000000e+00> : vector<4x32xf32>
    %108 = tpu.matmul %96, %0, %cst_50 {dimension_numbers = #tpu.dot_dimension_numbers<[1], [0], [0], [1], [0, 0, 1, 1], [], []>} : vector<4x32xf32>, vector<32x32xf32>, vector<4x32xf32> -> vector<4x32xf32>
    %109 = arith.addf %107, %108 : vector<4x32xf32>
    %110 = math.tanh %109 : vector<4x32xf32>
    %111 = tpu.concatenate %110, %100 in 1 : vector<4x32xf32>, vector<4x32xf32> -> vector<4x64xf32>
    %cst_51 = arith.constant dense<0.000000e+00> : vector<4x32xf32>
    %112 = tpu.matmul %111, %1, %cst_51 {dimension_numbers = #tpu.dot_dimension_numbers<[1], [0], [0], [1], [0, 0, 1, 1], [], []>} : vector<4x64xf32>, vector<64x32xf32>, vector<4x32xf32> -> vector<4x32xf32>
    %113 = arith.addf %112, %4 : vector<4x32xf32>
    %114 = math.tanh %113 : vector<4x32xf32>
    %115 = arith.index_cast %c7_i32 : i32 to index
    %c0_52 = arith.constant 0 : index
    %c0_53 = arith.constant 0 : index
    %116 = vector.load %arg4[%115, %c0_52, %c0_53] : memref<8x4x32xf32, #tpu.memory_space<vmem>>, vector<1x4x32xf32>
    %117 = vector.shape_cast %116 : vector<1x4x32xf32> to vector<4x32xf32>
    %118 = vector.shape_cast %114 : vector<4x32xf32> to vector<1x4x32xf32>
    tpu.vector_store %arg4[%115, %c0_52, %c0_53], %118 {strides = array<i32>} : memref<8x4x32xf32, #tpu.memory_space<vmem>>, vector<1x4x32xf32>,
    %c8_i32 = arith.constant 8 : i32
    return
  }
}

</mosaic_0001>

<llo_original>
// kernel: tpu_custom_call.1
$region0: #{tpu_custom_call.1}
  #allocation0 [shape = 'u32[]', space=smem, size = 0x4, offset = 0x4, fixed_abs, tag = 'smem constant byte address 0x4 - core index']
  #allocation1 [shape = 'u32[72,128]{1,0:T(1,128)}', space=vmem, size = 0x9000, scoped, tag = 'internal scratch']
  %s0 = inlined_call_operand.vmem [shape: f32[8,4,32], index: 0, kind: input, shape index: {}]
  %s1 = inlined_call_operand.vmem [shape: f32[32,32], index: 1, kind: input, shape index: {}]
  %s2 = inlined_call_operand.vmem [shape: f32[64,32], index: 2, kind: input, shape index: {}]
  %s3 = inlined_call_operand.vmem [shape: f32[1,32], index: 3, kind: input, shape index: {}]
  %s4 = inlined_call_operand.hbm [shape: f32[8,4,32], index: 4, kind: output, shape index: {}]
  %s5 = sld [smem:[#allocation0]]
  $region26: #{tpu_custom_call.1} parent=0
    _
  %s7 = ssub.s32 1, %s5
  %s8 = scalar_select 0, %s7, %s5
  $region1: #{tpu_custom_call.1} parent=0
    #allocation2 [shape = 'u8[16384]{0}', space=vmem, size = 0x4000, scoped, tag = 'output window, operand 0, single buffered']
    #allocation3 [shape = 's32[1]{0}', space=sflag, size = 0x4, scoped, tag = 'scoped memory for tpu_custom_call.1']
    %9 = vsyncpa [#allocation3], 0
    // Predicated region
    $region2: #{tpu_custom_call.1} parent=1 // pred_check
      _
    $region3: #{tpu_custom_call.1} parent=1 // pred_check_branch
      %11 = sbr.rel (0) target = $region5
    $region4: #{tpu_custom_call.1} parent=1 // pred_region
      _
    $region5: #{tpu_custom_call.1} parent=1 // pred_fallthru
      _
    // Predicated region
    $region6: #{tpu_custom_call.1} parent=1 // pred_check
      _
    $region7: #{tpu_custom_call.1} parent=1 // pred_check_branch
      %13 = sbr.rel (0) target = $region9
    $region8: #{tpu_custom_call.1} parent=1 // pred_region
      _
    $region9: #{tpu_custom_call.1} parent=1 // pred_fallthru
      _
    // Predicated region
    $region10: #{tpu_custom_call.1} parent=1 // pred_check
      _
    $region11: #{tpu_custom_call.1} parent=1 // pred_check_branch
      %15 = sbr.rel (0) target = $region13
    $region12: #{tpu_custom_call.1} parent=1 // pred_region
      _
    $region13: #{tpu_custom_call.1} parent=1 // pred_fallthru
      _
    // Predicated region
    $region14: #{tpu_custom_call.1} parent=1 // pred_check
      _
    $region15: #{tpu_custom_call.1} parent=1 // pred_check_branch
      %17 = sbr.rel (0) target = $region17
    $region16: #{tpu_custom_call.1} parent=1 // pred_region
      _
    $region17: #{tpu_custom_call.1} parent=1 // pred_fallthru
      _
    %v18 = vld [vmem:[%s1] sm:$0xff]
    %v19 = vld [vmem:[%s1 + $0x8] sm:$0xff]
    %v20 = vld [vmem:[%s1 + $0x10] sm:$0xff]
    %v21 = vld [vmem:[%s1 + $0x18] sm:$0xff]
    %v22 = vld [vmem:[%s2] sm:$0xff]
    %v23 = vld [vmem:[%s2 + $0x8] sm:$0xff]
    %v24 = vld [vmem:[%s2 + $0x10] sm:$0xff]
    %v25 = vld [vmem:[%s2 + $0x18] sm:$0xff]
    %v26 = vld [vmem:[%s2 + $0x20] sm:$0xff]
    %v27 = vld [vmem:[%s2 + $0x28] sm:$0xff]
    %v28 = vld [vmem:[%s2 + $0x30] sm:$0xff]
    %v29 = vld [vmem:[%s2 + $0x38] sm:$0xff]
    %v30 = vld [vmem:[%s3] sm:$0x1]
    %v32 = vperm.slane %v30, 0
    %v34 = vld [vmem:[%s0] sm:$0xf]
    %vm35 = vcmask 261120
    %v37 = vsel %vm35, 0.0, 0
    %39 = vmatpush.msra.mxu0 0.0
    %40 = vmatpush.msra.mxu0 0.0
    %41 = vmatpush.msra.mxu0 0.0
    %42 = vmatpush.msra.mxu0 0.0
    %43 = vmatpush.msra.mxu0 0.0
    %44 = vmatpush.msra.mxu0 0.0
    %45 = vmatpush.msra.mxu0 0.0
    %46 = vmatpush.msra.mxu0 0.0
    %47 = vmatpush.msra.mxu0 0.0
    %48 = vmatpush.msra.mxu0 0.0
    %49 = vmatpush.msra.mxu0 0.0
    %50 = vmatpush.msra.mxu0 0.0
    %51 = vmatpush.msra.mxu0 %v21
    %52 = vmatpush.msra.mxu0 %v20
    %53 = vmatpush.msra.mxu0 %v19
    %54 = vmatpush.msra.mxu0 %v18
    %55 = vmatmul.f32.gmra.mxu0 %v37
    %v56 = vpop.f32.mrf.mxu0
    %v57 = vadd.f32 0.0, %v56
    %58 = vdwg.mxu0
    %v59 = vadd.f32 %v34, %v57
    %v60 = vtanh.pop %v59
    %v61 = vsel %vm35, %v60, 0.0
    %vm62 = vcmask 523264
    %v64 = vsel %vm62, %v61, 0
    %66 = vmatpush.msra.mxu0 0.0
    %67 = vmatpush.msra.mxu0 0.0
    %68 = vmatpush.msra.mxu0 0.0
    %69 = vmatpush.msra.mxu0 0.0
    %70 = vmatpush.msra.mxu0 0.0
    %71 = vmatpush.msra.mxu0 0.0
    %72 = vmatpush.msra.mxu0 0.0
    %73 = vmatpush.msra.mxu0 0.0
    %74 = vmatpush.msra.mxu0 %v29
    %75 = vmatpush.msra.mxu0 %v28
    %76 = vmatpush.msra.mxu0 %v27
    %77 = vmatpush.msra.mxu0 %v26
    %78 = vmatpush.msra.mxu0 %v25
    %79 = vmatpush.msra.mxu0 %v24
    %80 = vmatpush.msra.mxu0 %v23
    %81 = vmatpush.msra.mxu0 %v22
    %82 = vmatmul.f32.gmra.mxu0 %v64
    %v83 = vpop.f32.mrf.mxu0
    %v84 = vadd.f32 %v32, %v83
    %85 = vdwg.mxu0
    %v86 = vtanh.pop %v84
    %vm87 = vcmask 257024
    %88 = vst.msk [vmem:[#allocation2] sm:$0xf] %vm87, %v86
    %s89 = scalar_lea.vmem %s0, 4
    %v90 = vld [vmem:[%s89] sm:$0xf]
    %v92 = vsel %vm35, %v60, 0
    %94 = vmatpush.msra.mxu0 0.0
    %95 = vmatpush.msra.mxu0 0.0
    %96 = vmatpush.msra.mxu0 0.0
    %97 = vmatpush.msra.mxu0 0.0
    %98 = vmatpush.msra.mxu0 0.0
    %99 = vmatpush.msra.mxu0 0.0
    %100 = vmatpush.msra.mxu0 0.0
    %101 = vmatpush.msra.mxu0 0.0
    %102 = vmatpush.msra.mxu0 0.0
    %103 = vmatpush.msra.mxu0 0.0
    %104 = vmatpush.msra.mxu0 0.0
    %105 = vmatpush.msra.mxu0 0.0
    %106 = vmatpush.msra.mxu0 %v21
    %107 = vmatpush.msra.mxu0 %v20
    %108 = vmatpush.msra.mxu0 %v19
    %109 = vmatpush.msra.mxu0 %v18
    %110 = vmatmul.f32.gmra.mxu0 %v92
    %v111 = vpop.f32.mrf.mxu0
    %v112 = vadd.f32 0.0, %v111
    %113 = vdwg.mxu0
    %v114 = vadd.f32 %v90, %v112
    %v115 = vtanh.pop %v114
    %117 = vrot.lane.b32.xlu0 %v86, 32
    %v118 = vpop.permute.xlu0 %117
    %v120 = vsel %vm35, %v115, %v118
    %v122 = vsel %vm62, %v120, 0
    %124 = vmatpush.msra.mxu0 0.0
    %125 = vmatpush.msra.mxu0 0.0
    %126 = vmatpush.msra.mxu0 0.0
    %127 = vmatpush.msra.mxu0 0.0
    %128 = vmatpush.msra.mxu0 0.0
    %129 = vmatpush.msra.mxu0 0.0
    %130 = vmatpush.msra.mxu0 0.0
    %131 = vmatpush.msra.mxu0 0.0
    %132 = vmatpush.msra.mxu0 %v29
    %133 = vmatpush.msra.mxu0 %v28
    %134 = vmatpush.msra.mxu0 %v27
    %135 = vmatpush.msra.mxu0 %v26
    %136 = vmatpush.msra.mxu0 %v25
    %137 = vmatpush.msra.mxu0 %v24
    %138 = vmatpush.msra.mxu0 %v23
    %139 = vmatpush.msra.mxu0 %v22
    %140 = vmatmul.f32.gmra.mxu0 %v122
    %v141 = vpop.f32.mrf.mxu0
    %v142 = vadd.f32 %v32, %v141
    %143 = vdwg.mxu0
    %v144 = vtanh.pop %v142
    %s145 = scalar_lea.vmem [#allocation2], 4
    %146 = vst.msk [vmem:[%s145] sm:$0xf] %vm87, %v144
    %s147 = scalar_lea.vmem %s0, 8
    %v148 = vld [vmem:[%s147] sm:$0xf]
    %v150 = vsel %vm35, %v115, 0
    %152 = vmatpush.msra.mxu0 0.0
    %153 = vmatpush.msra.mxu0 0.0
    %154 = vmatpush.msra.mxu0 0.0
    %155 = vmatpush.msra.mxu0 0.0
    %156 = vmatpush.msra.mxu0 0.0
    %157 = vmatpush.msra.mxu0 0.0
    %158 = vmatpush.msra.mxu0 0.0
    %159 = vmatpush.msra.mxu0 0.0
    %160 = vmatpush.msra.mxu0 0.0
    %161 = vmatpush.msra.mxu0 0.0
    %162 = vmatpush.msra.mxu0 0.0
    %163 = vmatpush.msra.mxu0 0.0
    %164 = vmatpush.msra.mxu0 %v21
    %165 = vmatpush.msra.mxu0 %v20
    %166 = vmatpush.msra.mxu0 %v19
    %167 = vmatpush.msra.mxu0 %v18
    %168 = vmatmul.f32.gmra.mxu0 %v150
    %v169 = vpop.f32.mrf.mxu0
    %v170 = vadd.f32 0.0, %v169
    %171 = vdwg.mxu0
    %v172 = vadd.f32 %v148, %v170
    %v173 = vtanh.pop %v172
    %175 = vrot.lane.b32.xlu0 %v144, 32
    %v176 = vpop.permute.xlu0 %175
    %v178 = vsel %vm35, %v173, %v176
    %v180 = vsel %vm62, %v178, 0
    %182 = vmatpush.msra.mxu0 0.0
    %183 = vmatpush.msra.mxu0 0.0
    %184 = vmatpush.msra.mxu0 0.0
    %185 = vmatpush.msra.mxu0 0.0
    %186 = vmatpush.msra.mxu0 0.0
    %187 = vmatpush.msra.mxu0 0.0
    %188 = vmatpush.msra.mxu0 0.0
    %189 = vmatpush.msra.mxu0 0.0
    %190 = vmatpush.msra.mxu0 %v29
    %191 = vmatpush.msra.mxu0 %v28
    %192 = vmatpush.msra.mxu0 %v27
    %193 = vmatpush.msra.mxu0 %v26
    %194 = vmatpush.msra.mxu0 %v25
    %195 = vmatpush.msra.mxu0 %v24
    %196 = vmatpush.msra.mxu0 %v23
    %197 = vmatpush.msra.mxu0 %v22
    %198 = vmatmul.f32.gmra.mxu0 %v180
    %v199 = vpop.f32.mrf.mxu0
    %v200 = vadd.f32 %v32, %v199
    %201 = vdwg.mxu0
    %v202 = vtanh.pop %v200
    %s203 = scalar_lea.vmem [#allocation2], 8
    %204 = vst.msk [vmem:[%s203] sm:$0xf] %vm87, %v202
    %s205 = scalar_lea.vmem %s0, 12
    %v206 = vld [vmem:[%s205] sm:$0xf]
    %v208 = vsel %vm35, %v173, 0
    %210 = vmatpush.msra.mxu0 0.0
    %211 = vmatpush.msra.mxu0 0.0
    %212 = vmatpush.msra.mxu0 0.0
    %213 = vmatpush.msra.mxu0 0.0
    %214 = vmatpush.msra.mxu0 0.0
    %215 = vmatpush.msra.mxu0 0.0
    %216 = vmatpush.msra.mxu0 0.0
    %217 = vmatpush.msra.mxu0 0.0
    %218 = vmatpush.msra.mxu0 0.0
    %219 = vmatpush.msra.mxu0 0.0
    %220 = vmatpush.msra.mxu0 0.0
    %221 = vmatpush.msra.mxu0 0.0
    %222 = vmatpush.msra.mxu0 %v21
    %223 = vmatpush.msra.mxu0 %v20
    %224 = vmatpush.msra.mxu0 %v19
    %225 = vmatpush.msra.mxu0 %v18
    %226 = vmatmul.f32.gmra.mxu0 %v208
    %v227 = vpop.f32.mrf.mxu0
    %v228 = vadd.f32 0.0, %v227
    %229 = vdwg.mxu0
    %v230 = vadd.f32 %v206, %v228
    %v231 = vtanh.pop %v230
    %233 = vrot.lane.b32.xlu0 %v202, 32
    %v234 = vpop.permute.xlu0 %233
    %v236 = vsel %vm35, %v231, %v234
    %v238 = vsel %vm62, %v236, 0
    %240 = vmatpush.msra.mxu0 0.0
    %241 = vmatpush.msra.mxu0 0.0
    %242 = vmatpush.msra.mxu0 0.0
    %243 = vmatpush.msra.mxu0 0.0
    %244 = vmatpush.msra.mxu0 0.0
    %245 = vmatpush.msra.mxu0 0.0
    %246 = vmatpush.msra.mxu0 0.0
    %247 = vmatpush.msra.mxu0 0.0
    %248 = vmatpush.msra.mxu0 %v29
    %249 = vmatpush.msra.mxu0 %v28
    %250 = vmatpush.msra.mxu0 %v27
    %251 = vmatpush.msra.mxu0 %v26
    %252 = vmatpush.msra.mxu0 %v25
    %253 = vmatpush.msra.mxu0 %v24
    %254 = vmatpush.msra.mxu0 %v23
    %255 = vmatpush.msra.mxu0 %v22
    %256 = vmatmul.f32.gmra.mxu0 %v238
    %v257 = vpop.f32.mrf.mxu0
    %v258 = vadd.f32 %v32, %v257
    %259 = vdwg.mxu0
    %v260 = vtanh.pop %v258
    %s261 = scalar_lea.vmem [#allocation2], 12
    %262 = vst.msk [vmem:[%s261] sm:$0xf] %vm87, %v260
    %s263 = scalar_lea.vmem %s0, 16
    %v264 = vld [vmem:[%s263] sm:$0xf]
    %v266 = vsel %vm35, %v231, 0
    %268 = vmatpush.msra.mxu0 0.0
    %269 = vmatpush.msra.mxu0 0.0
    %270 = vmatpush.msra.mxu0 0.0
    %271 = vmatpush.msra.mxu0 0.0
    %272 = vmatpush.msra.mxu0 0.0
    %273 = vmatpush.msra.mxu0 0.0
    %274 = vmatpush.msra.mxu0 0.0
    %275 = vmatpush.msra.mxu0 0.0
    %276 = vmatpush.msra.mxu0 0.0
    %277 = vmatpush.msra.mxu0 0.0
    %278 = vmatpush.msra.mxu0 0.0
    %279 = vmatpush.msra.mxu0 0.0
    %280 = vmatpush.msra.mxu0 %v21
    %281 = vmatpush.msra.mxu0 %v20
    %282 = vmatpush.msra.mxu0 %v19
    %283 = vmatpush.msra.mxu0 %v18
    %284 = vmatmul.f32.gmra.mxu0 %v266
    %v285 = vpop.f32.mrf.mxu0
    %v286 = vadd.f32 0.0, %v285
    %287 = vdwg.mxu0
    %v288 = vadd.f32 %v264, %v286
    %v289 = vtanh.pop %v288
    %291 = vrot.lane.b32.xlu0 %v260, 32
    %v292 = vpop.permute.xlu0 %291
    %v294 = vsel %vm35, %v289, %v292
    %v296 = vsel %vm62, %v294, 0
    %298 = vmatpush.msra.mxu0 0.0
    %299 = vmatpush.msra.mxu0 0.0
    %300 = vmatpush.msra.mxu0 0.0
    %301 = vmatpush.msra.mxu0 0.0
    %302 = vmatpush.msra.mxu0 0.0
    %303 = vmatpush.msra.mxu0 0.0
    %304 = vmatpush.msra.mxu0 0.0
    %305 = vmatpush.msra.mxu0 0.0
    %306 = vmatpush.msra.mxu0 %v29
    %307 = vmatpush.msra.mxu0 %v28
    %308 = vmatpush.msra.mxu0 %v27
    %309 = vmatpush.msra.mxu0 %v26
    %310 = vmatpush.msra.mxu0 %v25
    %311 = vmatpush.msra.mxu0 %v24
    %312 = vmatpush.msra.mxu0 %v23
    %313 = vmatpush.msra.mxu0 %v22
    %314 = vmatmul.f32.gmra.mxu0 %v296
    %v315 = vpop.f32.mrf.mxu0
    %v316 = vadd.f32 %v32, %v315
    %317 = vdwg.mxu0
    %v318 = vtanh.pop %v316
    %s319 = scalar_lea.vmem [#allocation2], 16
    %320 = vst.msk [vmem:[%s319] sm:$0xf] %vm87, %v318
    %s321 = scalar_lea.vmem %s0, 20
    %v322 = vld [vmem:[%s321] sm:$0xf]
    %v324 = vsel %vm35, %v289, 0
    %326 = vmatpush.msra.mxu0 0.0
    %327 = vmatpush.msra.mxu0 0.0
    %328 = vmatpush.msra.mxu0 0.0
    %329 = vmatpush.msra.mxu0 0.0
    %330 = vmatpush.msra.mxu0 0.0
    %331 = vmatpush.msra.mxu0 0.0
    %332 = vmatpush.msra.mxu0 0.0
    %333 = vmatpush.msra.mxu0 0.0
    %334 = vmatpush.msra.mxu0 0.0
    %335 = vmatpush.msra.mxu0 0.0
    %336 = vmatpush.msra.mxu0 0.0
    %337 = vmatpush.msra.mxu0 0.0
    %338 = vmatpush.msra.mxu0 %v21
    %339 = vmatpush.msra.mxu0 %v20
    %340 = vmatpush.msra.mxu0 %v19
    %341 = vmatpush.msra.mxu0 %v18
    %342 = vmatmul.f32.gmra.mxu0 %v324
    %v343 = vpop.f32.mrf.mxu0
    %v344 = vadd.f32 0.0, %v343
    %345 = vdwg.mxu0
    %v346 = vadd.f32 %v322, %v344
    %v347 = vtanh.pop %v346
    %349 = vrot.lane.b32.xlu0 %v318, 32
    %v350 = vpop.permute.xlu0 %349
    %v352 = vsel %vm35, %v347, %v350
    %v354 = vsel %vm62, %v352, 0
    %356 = vmatpush.msra.mxu0 0.0
    %357 = vmatpush.msra.mxu0 0.0
    %358 = vmatpush.msra.mxu0 0.0
    %359 = vmatpush.msra.mxu0 0.0
    %360 = vmatpush.msra.mxu0 0.0
    %361 = vmatpush.msra.mxu0 0.0
    %362 = vmatpush.msra.mxu0 0.0
    %363 = vmatpush.msra.mxu0 0.0
    %364 = vmatpush.msra.mxu0 %v29
    %365 = vmatpush.msra.mxu0 %v28
    %366 = vmatpush.msra.mxu0 %v27
    %367 = vmatpush.msra.mxu0 %v26
    %368 = vmatpush.msra.mxu0 %v25
    %369 = vmatpush.msra.mxu0 %v24
    %370 = vmatpush.msra.mxu0 %v23
    %371 = vmatpush.msra.mxu0 %v22
    %372 = vmatmul.f32.gmra.mxu0 %v354
    %v373 = vpop.f32.mrf.mxu0
    %v374 = vadd.f32 %v32, %v373
    %375 = vdwg.mxu0
    %v376 = vtanh.pop %v374
    %s377 = scalar_lea.vmem [#allocation2], 20
    %378 = vst.msk [vmem:[%s377] sm:$0xf] %vm87, %v376
    %s379 = scalar_lea.vmem %s0, 24
    %v380 = vld [vmem:[%s379] sm:$0xf]
    %v382 = vsel %vm35, %v347, 0
    %384 = vmatpush.msra.mxu0 0.0
    %385 = vmatpush.msra.mxu0 0.0
    %386 = vmatpush.msra.mxu0 0.0
    %387 = vmatpush.msra.mxu0 0.0
    %388 = vmatpush.msra.mxu0 0.0
    %389 = vmatpush.msra.mxu0 0.0
    %390 = vmatpush.msra.mxu0 0.0
    %391 = vmatpush.msra.mxu0 0.0
    %392 = vmatpush.msra.mxu0 0.0
    %393 = vmatpush.msra.mxu0 0.0
    %394 = vmatpush.msra.mxu0 0.0
    %395 = vmatpush.msra.mxu0 0.0
    %396 = vmatpush.msra.mxu0 %v21
    %397 = vmatpush.msra.mxu0 %v20
    %398 = vmatpush.msra.mxu0 %v19
    %399 = vmatpush.msra.mxu0 %v18
    %400 = vmatmul.f32.gmra.mxu0 %v382
    %v401 = vpop.f32.mrf.mxu0
    %v402 = vadd.f32 0.0, %v401
    %403 = vdwg.mxu0
    %v404 = vadd.f32 %v380, %v402
    %v405 = vtanh.pop %v404
    %407 = vrot.lane.b32.xlu0 %v376, 32
    %v408 = vpop.permute.xlu0 %407
    %v410 = vsel %vm35, %v405, %v408
    %v412 = vsel %vm62, %v410, 0
    %414 = vmatpush.msra.mxu0 0.0
    %415 = vmatpush.msra.mxu0 0.0
    %416 = vmatpush.msra.mxu0 0.0
    %417 = vmatpush.msra.mxu0 0.0
    %418 = vmatpush.msra.mxu0 0.0
    %419 = vmatpush.msra.mxu0 0.0
    %420 = vmatpush.msra.mxu0 0.0
    %421 = vmatpush.msra.mxu0 0.0
    %422 = vmatpush.msra.mxu0 %v29
    %423 = vmatpush.msra.mxu0 %v28
    %424 = vmatpush.msra.mxu0 %v27
    %425 = vmatpush.msra.mxu0 %v26
    %426 = vmatpush.msra.mxu0 %v25
    %427 = vmatpush.msra.mxu0 %v24
    %428 = vmatpush.msra.mxu0 %v23
    %429 = vmatpush.msra.mxu0 %v22
    %430 = vmatmul.f32.gmra.mxu0 %v412
    %v431 = vpop.f32.mrf.mxu0
    %v432 = vadd.f32 %v32, %v431
    %433 = vdwg.mxu0
    %v434 = vtanh.pop %v432
    %s435 = scalar_lea.vmem [#allocation2], 24
    %436 = vst.msk [vmem:[%s435] sm:$0xf] %vm87, %v434
    %s437 = scalar_lea.vmem %s0, 28
    %v438 = vld [vmem:[%s437] sm:$0xf]
    %v440 = vsel %vm35, %v405, 0
    %442 = vmatpush.msra.mxu0 0.0
    %443 = vmatpush.msra.mxu0 0.0
    %444 = vmatpush.msra.mxu0 0.0
    %445 = vmatpush.msra.mxu0 0.0
    %446 = vmatpush.msra.mxu0 0.0
    %447 = vmatpush.msra.mxu0 0.0
    %448 = vmatpush.msra.mxu0 0.0
    %449 = vmatpush.msra.mxu0 0.0
    %450 = vmatpush.msra.mxu0 0.0
    %451 = vmatpush.msra.mxu0 0.0
    %452 = vmatpush.msra.mxu0 0.0
    %453 = vmatpush.msra.mxu0 0.0
    %454 = vmatpush.msra.mxu0 %v21
    %455 = vmatpush.msra.mxu0 %v20
    %456 = vmatpush.msra.mxu0 %v19
    %457 = vmatpush.msra.mxu0 %v18
    %458 = vmatmul.f32.gmra.mxu0 %v440
    %v459 = vpop.f32.mrf.mxu0
    %v460 = vadd.f32 0.0, %v459
    %461 = vdwg.mxu0
    %v462 = vadd.f32 %v438, %v460
    %v463 = vtanh.pop %v462
    %465 = vrot.lane.b32.xlu0 %v434, 32
    %v466 = vpop.permute.xlu0 %465
    %v468 = vsel %vm35, %v463, %v466
    %v470 = vsel %vm62, %v468, 0
    %472 = vmatpush.msra.mxu0 0.0
    %473 = vmatpush.msra.mxu0 0.0
    %474 = vmatpush.msra.mxu0 0.0
    %475 = vmatpush.msra.mxu0 0.0
    %476 = vmatpush.msra.mxu0 0.0
    %477 = vmatpush.msra.mxu0 0.0
    %478 = vmatpush.msra.mxu0 0.0
    %479 = vmatpush.msra.mxu0 0.0
    %480 = vmatpush.msra.mxu0 %v29
    %481 = vmatpush.msra.mxu0 %v28
    %482 = vmatpush.msra.mxu0 %v27
    %483 = vmatpush.msra.mxu0 %v26
    %484 = vmatpush.msra.mxu0 %v25
    %485 = vmatpush.msra.mxu0 %v24
    %486 = vmatpush.msra.mxu0 %v23
    %487 = vmatpush.msra.mxu0 %v22
    %488 = vmatmul.f32.gmra.mxu0 %v470
    %v489 = vpop.f32.mrf.mxu0
    %v490 = vadd.f32 %v32, %v489
    %491 = vdwg.mxu0
    %v492 = vtanh.pop %v490
    %s493 = scalar_lea.vmem [#allocation2], 28
    %494 = vst.msk [vmem:[%s493] sm:$0xf] %vm87, %v492
    // Predicated region
    $region18: #{tpu_custom_call.1} parent=1 // pred_check
      _
    $region19: #{tpu_custom_call.1} parent=1 // pred_check_branch
      %496 = sbr.rel (0) target = $region21
    $region20: #{tpu_custom_call.1} parent=1 // pred_region
      %498 = vsyncadd [#allocation3], 0
      %s499 = sshll.u32 [#allocation2], 4
      %s500 = int_to_ptr.vmem [resolvable:$true] %s499
      %s501 = sshll.u32 %s4, 4
      %s502 = int_to_ptr.hbm [resolvable:$true] %s501
      %507 = dma.vmem_to_hbm [thread:$0]  %s500, 512, %s502, [#allocation3], 64, 64, 4
    $region21: #{tpu_custom_call.1} parent=1 // pred_fallthru
      _
    // Predicated region
    $region22: #{tpu_custom_call.1} parent=1 // pred_check
      _
    $region23: #{tpu_custom_call.1} parent=1 // pred_check_branch
      %509 = sbr.rel (0) target = $region25
    $region24: #{tpu_custom_call.1} parent=1 // pred_region
      %511 = dma.done [#allocation3], 512
    $region25: #{tpu_custom_call.1} parent=1 // pred_fallthru
      _
    %512 = vsyncpa [#allocation3], 1

</llo_original>
